<compile_context>
chip_gen: v7x
topology: tpu7x:2x2x1
jax: 0.10.0
libtpu: 0.0.40
codegen_flags: <defaults>
</compile_context>

<pallas_src>
import functools
import math

import jax
import jax.numpy as jnp
from jax.experimental import pallas as pl
from jax.experimental.pallas import tpu as pltpu

M_MARGIN = 0.6
S_SCALE = 30.0
_TGT_W = math.exp(-S_SCALE * M_MARGIN)      # exp(-s*m): weight on the target exp
_SM = S_SCALE * M_MARGIN


def _cosine_margin_ce_kernel(x_ref, tgt_ref, out_ref, *, true_b, tile_b):
    # Upcast inside the kernel so bf16 cosine logits can be streamed from HBM
    # at half the bytes (preferred input dtype on HBM-bound v5e/v6e).
    z = S_SCALE * x_ref[...].astype(jnp.float32)            # (TB, C)
    tgt = tgt_ref[...]                                       # (TB, 1) int32
    tb, c = z.shape

    # one-hot as a bool mask: (1, C) lane iota vs (TB, 1) targets -> (TB, C)
    class_ids = jax.lax.broadcasted_iota(jnp.int32, (1, c), 1)
    mask = class_ids == tgt

    # numerically stable logsumexp of the *margined* logits:
    #   sum_j exp(s*x_j - s*m*[j==t] - rowmax) == sum_j w_j * exp(s*x_j - rowmax)
    # with w_t = exp(-s*m), w_j = 1 otherwise.  All-positive sum, no cancellation.
    row_max = jnp.max(z, axis=-1, keepdims=True)             # (TB, 1)
    e = jnp.exp(z - row_max)                                  # (TB, C) EUP
    w = jnp.where(mask, jnp.float32(_TGT_W), jnp.float32(1.0))
    lse = jnp.log(jnp.sum(w * e, axis=-1, keepdims=True)) + row_max   # (TB, 1)

    # margined target logit: s*x_t - s*m  (masked sum, no gather)
    tgt_logit = jnp.sum(jnp.where(mask, z, 0.0), axis=-1, keepdims=True) - _SM
    per_row = lse - tgt_logit                                 # (TB, 1)

    # select-based masking of the ragged last block's undefined rows (never a
    # multiplicative mask: garbage rows may hold NaN/Inf), so the mean always
    # divides by the true batch size.
    row_ids = pl.program_id(0) * tile_b + jax.lax.broadcasted_iota(
        jnp.int32, (tb, 1), 0)
    per_row = jnp.where(row_ids < true_b, per_row, 0.0)

    out_ref[...] = jnp.sum(per_row).reshape(1, 1, 1)


def _round_up(v, m):
    return ((v + m - 1) // m) * m


def _vmem_plan():
    """Generation-aware (scoped_vmem_limit, per-x-buffer byte budget)."""
    cap = 64 * 1024 * 1024                       # conservative default (v7x per-TC)
    try:
        info = pltpu.get_tpu_info()
        cap = int(getattr(info, "vmem_capacity_bytes", cap)) or cap
    except Exception:
        pass
    # v5e/v6e (128 MiB) -> 64 MiB limit / 16 MiB budget; v7x (64 MiB) -> 48 / 12.
    limit = min((cap * 3) // 4, 64 * 1024 * 1024)
    budget = limit // 4                          # x is double-buffered + headroom
    return limit, budget


def _choose_tile_b(B, C, itemsize, budget):
    row_mult = 16 if itemsize < 4 else 8         # bf16 packs 16 rows per vreg
    tb = budget // max(1, C * itemsize)          # size by bytes, not rows
    tb = max(row_mult, (tb // row_mult) * row_mult)
    tb = min(tb, _round_up(B, row_mult))         # never larger than the batch
    if B > row_mult:
        # keep >= 2 grid steps so the "parallel" axis splits across v7x's 2 TCs
        tb = min(tb, _round_up(pl.cdiv(B, 2), row_mult))
    return tb


def cosine_margin_cross_entropy(x, target):
    """x: (B, C) cosine logits (f32 or bf16 -- bf16 preferred: the kernel upcasts
    internally and halves HBM traffic on this memory-bound op), target: (B,) int
    class ids (assumed valid, no ignore_index).  Returns scalar mean loss."""
    B, C = x.shape
    itemsize = jnp.dtype(x.dtype).itemsize
    vmem_limit, budget = _vmem_plan()
    tile_b = _choose_tile_b(B, C, itemsize, budget)
    num_tiles = pl.cdiv(B, tile_b)

    tgt2d = target.astype(jnp.int32).reshape(B, 1)

    x_tile_bytes = tile_b * C * itemsize
    if 2 * x_tile_bytes + (1 << 20) <= vmem_limit:
        x_spec = pl.BlockSpec((tile_b, C), lambda i: (i, 0))
    else:
        # TODO(synk): class-axis online-logsumexp tiling for very large C; for now
        # drop to single buffering so one full class row still fits in VMEM.
        x_spec = pl.BlockSpec((tile_b, C), lambda i: (i, 0),
                              pipeline_mode=pl.Buffered(1))

    kernel = functools.partial(_cosine_margin_ce_kernel, true_b=B, tile_b=tile_b)

    partials = pl.pallas_call(
        kernel,
        out_shape=jax.ShapeDtypeStruct((num_tiles, 1, 1), jnp.float32),
        grid=(num_tiles,),
        in_specs=[
            x_spec,
            pl.BlockSpec((tile_b, 1), lambda i: (i, 0)),
        ],
        out_specs=pl.BlockSpec((1, 1, 1), lambda i: (i, 0, 0)),
        compiler_params=pltpu.CompilerParams(
            dimension_semantics=("parallel",),
            vmem_limit_bytes=vmem_limit,
        ),
    )(x, tgt2d)

    # final reduction over per-tile partial sums; divide by the TRUE batch size
    return jnp.sum(partials) / B


def _reference(x, target):
    # pure-JAX reference of the PyTorch forward
    B, C = x.shape
    one_hot = jax.nn.one_hot(target, C, dtype=x.dtype)
    logits = S_SCALE * (x - one_hot * M_MARGIN)
    logp = jax.nn.log_softmax(logits, axis=-1)
    return -jnp.mean(jnp.take_along_axis(logp, target[:, None], axis=1))


if __name__ == "__main__":
    key = jax.random.PRNGKey(0)
    kx, kt = jax.random.split(key)

    # primary small case (B, num_classes) — cosine-like inputs in [-1, 1]
    B, C = 8, 32
    x = jnp.tanh(jax.random.normal(kx, (B, C), dtype=jnp.float32))
    target = jax.random.randint(kt, (B,), 0, C, dtype=jnp.int32)
    loss = cosine_margin_cross_entropy(x, target)
    jax.block_until_ready(loss)
    ref = _reference(x, target)
    assert jnp.allclose(loss, ref, atol=1e-4, rtol=1e-4), (loss, ref)

    # ragged-batch case: exercises the no-pad partial last block + 2-step grid
    B2, C2 = 20, 32
    kx2, kt2 = jax.random.split(jax.random.PRNGKey(1))
    x2 = jnp.tanh(jax.random.normal(kx2, (B2, C2), dtype=jnp.float32))
    t2 = jax.random.randint(kt2, (B2,), 0, C2, dtype=jnp.int32)
    loss2 = cosine_margin_cross_entropy(x2, t2)
    jax.block_until_ready(loss2)
    ref2 = _reference(x2, t2)
    assert jnp.allclose(loss2, ref2, atol=1e-4, rtol=1e-4), (loss2, ref2)

    print("KERNEL_OK")
</pallas_src>

<mosaic_0001>
module attributes {stable_mosaic.version = 11 : i64} {
  func.func @_cosine_margin_ce_kernel(%arg0: i32, %arg1: memref<8x32xf32, #tpu.memory_space<vmem>>, %arg2: memref<8x1xi32, #tpu.memory_space<vmem>>, %arg3: memref<1x1x1xf32, #tpu.memory_space<vmem>>) attributes {dimension_semantics = [#tpu.dimension_semantics<parallel>], iteration_bounds = array<i64: 1>, scalar_prefetch = 0 : i64, scratch_operands = 0 : i64, tpu.core_type = #tpu.core_type<tc>, window_params = [{transform_indices = @transform_0, window_bounds = array<i64: 8, 32>}, {transform_indices = @transform_1, window_bounds = array<i64: 8, 1>}, {transform_indices = @transform_2, window_bounds = array<i64: 1, 1, 1>}]} {
    %c0 = arith.constant 0 : index
    %c0_0 = arith.constant 0 : index
    %0 = vector.load %arg1[%c0, %c0_0] : memref<8x32xf32, #tpu.memory_space<vmem>>, vector<8x32xf32>
    %cst = arith.constant 3.000000e+01 : f32
    %1 = vector.broadcast %cst : f32 to vector<8x32xf32>
    %2 = arith.mulf %1, %0 : vector<8x32xf32>
    %c0_1 = arith.constant 0 : index
    %c0_2 = arith.constant 0 : index
    %3 = vector.load %arg2[%c0_1, %c0_2] : memref<8x1xi32, #tpu.memory_space<vmem>>, vector<8x1xi32>
    %4 = tpu.iota {dimensions = array<i32: 1>} : vector<1x32xi32>
    %5 = vector.broadcast %4 : vector<1x32xi32> to vector<8x32xi32>
    %6 = vector.broadcast %3 : vector<8x1xi32> to vector<8x32xi32>
    %7 = arith.cmpi eq, %5, %6 : vector<8x32xi32>
    %cst_3 = arith.constant dense<0xFF800000> : vector<8xf32>
    %8 = vector.multi_reduction <maximumf>, %2, %cst_3 [1] : vector<8x32xf32> to vector<8xf32>
    %9 = vector.shape_cast %8 : vector<8xf32> to vector<8x1xf32>
    %10 = vector.broadcast %9 : vector<8x1xf32> to vector<8x32xf32>
    %11 = arith.subf %2, %10 : vector<8x32xf32>
    %12 = math.exp %11 : vector<8x32xf32>
    %cst_4 = arith.constant 1.52299791E-8 : f32
    %cst_5 = arith.constant 1.000000e+00 : f32
    %13 = vector.broadcast %cst_4 : f32 to vector<8x32xf32>
    %14 = vector.broadcast %cst_5 : f32 to vector<8x32xf32>
    %15 = arith.select %7, %13, %14 : vector<8x32xi1>, vector<8x32xf32>
    %16 = arith.mulf %15, %12 : vector<8x32xf32>
    %cst_6 = arith.constant dense<0.000000e+00> : vector<8xf32>
    %17 = vector.multi_reduction <add>, %16, %cst_6 [1] : vector<8x32xf32> to vector<8xf32>
    %18 = vector.shape_cast %17 : vector<8xf32> to vector<8x1xf32>
    %19 = math.log %18 : vector<8x1xf32>
    %20 = arith.addf %19, %9 : vector<8x1xf32>
    %cst_7 = arith.constant 0.000000e+00 : f32
    %21 = vector.broadcast %cst_7 : f32 to vector<8x32xf32>
    %22 = arith.select %7, %2, %21 : vector<8x32xi1>, vector<8x32xf32>
    %cst_8 = arith.constant dense<0.000000e+00> : vector<8xf32>
    %23 = vector.multi_reduction <add>, %22, %cst_8 [1] : vector<8x32xf32> to vector<8xf32>
    %24 = vector.shape_cast %23 : vector<8xf32> to vector<8x1xf32>
    %cst_9 = arith.constant 1.800000e+01 : f32
    %25 = vector.broadcast %cst_9 : f32 to vector<8x1xf32>
    %26 = arith.subf %24, %25 : vector<8x1xf32>
    %27 = arith.subf %20, %26 : vector<8x1xf32>
    %c8_i32 = arith.constant 8 : i32
    %28 = arith.muli %arg0, %c8_i32 : i32
    %29 = tpu.iota {dimensions = array<i32: 0>} : vector<8x1xi32>
    %30 = vector.broadcast %28 : i32 to vector<8x1xi32>
    %31 = arith.addi %30, %29 : vector<8x1xi32>
    %c8_i32_10 = arith.constant 8 : i32
    %32 = vector.broadcast %c8_i32_10 : i32 to vector<8x1xi32>
    %33 = arith.cmpi slt, %31, %32 : vector<8x1xi32>
    %cst_11 = arith.constant 0.000000e+00 : f32
    %34 = vector.broadcast %cst_11 : f32 to vector<8x1xf32>
    %35 = arith.select %33, %27, %34 : vector<8x1xi1>, vector<8x1xf32>
    %36 = vector.shape_cast %35 : vector<8x1xf32> to vector<1x8x1xf32>
    %cst_12 = arith.constant dense<0.000000e+00> : vector<1xf32>
    %37 = vector.multi_reduction <add>, %36, %cst_12 [1, 2] : vector<1x8x1xf32> to vector<1xf32>
    %38 = vector.shape_cast %37 : vector<1xf32> to vector<1x1x1xf32>
    %39 = vector.extract %38[0, 0, 0] : f32 from vector<1x1x1xf32>
    %40 = vector.broadcast %39 : f32 to vector<1x1x1xf32>
    %c0_13 = arith.constant 0 : index
    %c0_14 = arith.constant 0 : index
    %c0_15 = arith.constant 0 : index
    %41 = vector.load %arg3[%c0_13, %c0_14, %c0_15] : memref<1x1x1xf32, #tpu.memory_space<vmem>>, vector<1x1x1xf32>
    tpu.vector_store %arg3[%c0_13, %c0_14, %c0_15], %40 {strides = array<i32>} : memref<1x1x1xf32, #tpu.memory_space<vmem>>, vector<1x1x1xf32>,
    return
  }
  func.func @transform_0(%arg0: i32) -> (i32, i32) {
    %c0_i32 = arith.constant 0 : i32
    %c0_i32_0 = arith.constant 0 : i32
    return %arg0, %c0_i32 : i32, i32
  }
  func.func @transform_1(%arg0: i32) -> (i32, i32) {
    %c0_i32 = arith.constant 0 : i32
    %c0_i32_0 = arith.constant 0 : i32
    return %arg0, %c0_i32 : i32, i32
  }
  func.func @transform_2(%arg0: i32) -> (i32, i32, i32) {
    %c0_i32 = arith.constant 0 : i32
    %c0_i32_0 = arith.constant 0 : i32
    %c0_i32_1 = arith.constant 0 : i32
    return %arg0, %c0_i32, %c0_i32_0 : i32, i32, i32
  }
}

</mosaic_0001>

<llo_original>
// kernel: tpu_custom_call.1
$region0: #{tpu_custom_call.1}
  #allocation0 [shape = 'u32[]', space=smem, size = 0x4, offset = 0x4, fixed_abs, tag = 'smem constant byte address 0x4 - core index']
  #allocation1 [shape = 'u32[144,128]{1,0:T(1,128)}', space=vmem, size = 0x12000, scoped, tag = 'internal scratch']
  %s0 = inlined_call_operand.vmem [shape: f32[8,32], index: 0, kind: input, shape index: {}]
  %s1 = inlined_call_operand.vmem [shape: s32[8,1], index: 1, kind: input, shape index: {}]
  %s2 = inlined_call_operand.hbm [shape: f32[1,1,1], index: 2, kind: output, shape index: {}]
  %s3 = sld [smem:[#allocation0]]
  $region18: #{tpu_custom_call.1} parent=0
    _
  %s5 = ssub.s32 1, %s3
  %s6 = scalar_select 0, %s5, %s3
  $region1: #{tpu_custom_call.1} parent=0
    #allocation2 [shape = 'u8[512]{0}', space=vmem, size = 0x400, scoped, tag = 'output window, operand 0, single buffered']
    #allocation3 [shape = 's32[1]{0}', space=sflag, size = 0x4, scoped, tag = 'scoped memory for tpu_custom_call.1']
    %7 = vsyncpa [#allocation3], 0
    // Predicated region
    $region2: #{tpu_custom_call.1} parent=1 // pred_check
      _
    $region3: #{tpu_custom_call.1} parent=1 // pred_check_branch
      %9 = sbr.rel (0) target = $region5
    $region4: #{tpu_custom_call.1} parent=1 // pred_region
      _
    $region5: #{tpu_custom_call.1} parent=1 // pred_fallthru
      _
    // Predicated region
    $region6: #{tpu_custom_call.1} parent=1 // pred_check
      _
    $region7: #{tpu_custom_call.1} parent=1 // pred_check_branch
      %11 = sbr.rel (0) target = $region9
    $region8: #{tpu_custom_call.1} parent=1 // pred_region
      _
    $region9: #{tpu_custom_call.1} parent=1 // pred_fallthru
      _
    %v12 = vld [vmem:[%s0] sm:$0xff]
    %v13 = vmul.f32 %v12, 30.0
    %v14 = vld [vmem:[%s1] sm:$0xff]
    %v15 = vlaneseq
    %v16 = vand.u32 %v15, 127
    %17 = vset.pattern.permute.xlu0 0
    %18 = vperm.xlu0 %17, %v14
    %v19 = vpop.permute.xlu0 %18
    %vm20 = vcmp.eq.s32.totalorder %v16, %v19
    %vm21 = vcmask 261120
    %v22 = vsel %vm21, %v13, -inf
    %23 = vmax.xlane.f32.xlu0 %v22
    %v24 = vpop.xlane.xlu0 %23
    %v25 = vsub.f32 %v13, %v24
    %v26 = vmul.f32 %v25, 1.442695
    %v27 = vpow.pop %v26
    %v28 = vsel %vm20, 1.5229979e-08, 1.0
    %v29 = vmul.f32 %v28, %v27
    %v30 = vsel %vm21, %v29, 0.0
    %31 = vadd.xlane.f32.xlu0 %v30
    %v32 = vpop.xlane.xlu0 %31
    %v33 = vlog2.pop %v32
    %v34 = vmul.f32 %v33, 0.6931472
    %v35 = vadd.f32 %v34, %v24
    %v36 = vsel %vm20, %v13, 0.0
    %v37 = vsel %vm21, %v36, 0.0
    %38 = vadd.xlane.f32.xlu0 %v37
    %v39 = vpop.xlane.xlu0 %38
    %v40 = vsub.f32 %v39, 18.0
    %v41 = vsub.f32 %v35, %v40
    %s42 = smul.u32 0, 8
    %v43 = vlaneseq
    %v44 = vshrl.u32 %v43, 7
    %v45 = vstv %s42
    %v46 = vadd.s32 %v45, %v44
    %vm47 = vcmp.lt.s32.totalorder %v46, 8
    %v48 = vsel %vm47, %v41, 0.0
    %vm49 = vcmask 7168
    %v50 = vsel %vm49, %v48, 0.0
    %51 = vadd.xlane.f32.xlu0 %v50
    %v52 = vpop.xlane.xlu0 %51
    %v53 = vrot.slane %v52, 4
    %v54 = vadd.f32 %v52, %v53
    %v55 = vrot.slane %v54, 2
    %v56 = vadd.f32 %v54, %v55
    %v57 = vrot.slane %v56, 1
    %v58 = vadd.f32 %v56, %v57
    %s59 = vtos %v58
    %v60 = vstv %s59
    %vm61 = vcmask 0
    %62 = vst.msk [vmem:[#allocation2] sm:$0x1] %vm61, %v60
    // Predicated region
    $region10: #{tpu_custom_call.1} parent=1 // pred_check
      _
    $region11: #{tpu_custom_call.1} parent=1 // pred_check_branch
      %64 = sbr.rel (0) target = $region13
    $region12: #{tpu_custom_call.1} parent=1 // pred_region
      %s66 = ssub.s32 16, 16
      %67 = vsyncadd [#allocation3], %s66
      %s69 = sshll.u32 [#allocation2], 4
      %s70 = int_to_ptr.vmem [resolvable:$true] %s69
      %72 = dma.vmem_to_hbm [thread:$0]  %s70, 16, %s2, [#allocation3]
    $region13: #{tpu_custom_call.1} parent=1 // pred_fallthru
      _
    // Predicated region
    $region14: #{tpu_custom_call.1} parent=1 // pred_check
      _
    $region15: #{tpu_custom_call.1} parent=1 // pred_check_branch
      %74 = sbr.rel (0) target = $region17
    $region16: #{tpu_custom_call.1} parent=1 // pred_region
      %75 = dma.done [#allocation3], 16
    $region17: #{tpu_custom_call.1} parent=1 // pred_fallthru
      _
    %76 = vsyncpa [#allocation3], 1

</llo_original>
